<compile_context>
chip_gen: v6e
topology: v6e:2x2x1
jax: 0.10.0
libtpu: 0.0.40
codegen_flags: <defaults>
</compile_context>

<pallas_src>
import functools

import jax
import jax.numpy as jnp
from jax import lax
from jax.experimental import pallas as pl
from jax.experimental.pallas import tpu as pltpu


# ---------------------------------------------------------------------------
# Pass 1: head-mean + score + vectorised iterative top-k -> (TB, K) indices
# ---------------------------------------------------------------------------
def _topk_indices(score, idx_out_ref, *, top_k, n_feats):
    """score: (TB, S) f32 with lane 0 (CLS) already masked to -inf."""
    S = score.shape[-1]
    lane_s = lax.broadcasted_iota(jnp.int32, (1, S), 1)
    col_k = lax.broadcasted_iota(jnp.int32, (1, top_k), 1)
    hi = min(S - 1, n_feats)          # clamp so the gather DMA can never go OOB
    idx_row = jnp.zeros(idx_out_ref.shape, jnp.int32)
    # top_k is small & static -> full unroll (serially dependent chain).
    # TODO(synk): pack (value, lane) into one sortable 32-bit key to halve the
    # two cross-lane reductions per step (scores are >= 0 here).
    for k in range(top_k):
        m = jnp.max(score, axis=-1, keepdims=True)                  # (TB, 1)
        # first-occurring argmax (deterministic tie-break, matches lax.top_k)
        sel = jnp.min(jnp.where(score == m, lane_s, S),
                      axis=-1, keepdims=True)                       # (TB, 1)
        patch = jnp.clip(sel, 1, hi) - 1                            # feats row
        idx_row = jnp.where(col_k == k, patch, idx_row)
        score = jnp.where(lane_s == sel, -jnp.inf, score)
    idx_out_ref[...] = idx_row


def _cls_topk_kernel(post_row_ref, idx_out_ref, *, top_k, n_feats):
    # post_row_ref: (TB, L, S) = attn_drop[b0:b0+TB, :, 0, :]
    post = jnp.mean(post_row_ref[...], axis=1)                       # (TB, S)
    S = post.shape[-1]
    lane_s = lax.broadcasted_iota(jnp.int32, (1, S), 1)
    score = jnp.where(lane_s == 0, -jnp.inf, post)                   # mask CLS
    _topk_indices(score, idx_out_ref, top_k=top_k, n_feats=n_feats)


def _maws_topk_kernel(pre_col_ref, post_row_ref, idx_out_ref, *, top_k, n_feats):
    # pre_col_ref : (TB, L, S) = pre_softmax[b0:b0+TB, :, :, 0]
    # post_row_ref: (TB, L, S) = attn_drop[b0:b0+TB, :, 0, :]
    post = jnp.mean(post_row_ref[...], axis=1)                       # (TB, S)
    pre_col = jnp.mean(pre_col_ref[...], axis=1)                     # (TB, S)
    # softmax over dim=-2 restricted to column 0; the denominator is a uniform
    # positive per-batch scale and post >= 0 (softmax output with dropout
    # zeros), so dropping it cannot change the top-k ordering.
    m = jnp.max(pre_col, axis=-1, keepdims=True)
    w = jnp.exp(pre_col - m)                                         # EUP
    S = post.shape[-1]
    lane_s = lax.broadcasted_iota(jnp.int32, (1, S), 1)
    score = jnp.where(lane_s == 0, -jnp.inf, w * post)               # mask CLS
    _topk_indices(score, idx_out_ref, top_k=top_k, n_feats=n_feats)


# ---------------------------------------------------------------------------
# Pass 2: data-dependent row gather.  feats stays in HBM; scalar-prefetched
# indices drive K row DMAs per batch element (exact copies, ~K*D bytes read).
# ---------------------------------------------------------------------------
def _gather_kernel(idx_ref, feats_hbm, out_ref, buf, sem, *, top_k, tb, batch):
    bidx = pl.program_id(0)

    # Issue all row DMAs for the TB batch elements of this step.
    for t in range(tb):                               # static unroll
        b = bidx * tb + t

        @pl.when(b < batch)                           # guard partial last block
        def _():
            for k in range(top_k):
                pltpu.make_async_copy(
                    feats_hbm.at[b, pl.ds(idx_ref[b, k], 1), :],
                    buf.at[t, pl.ds(k, 1), :],
                    sem.at[t, k]).start()

    # Wait for completion, then one dense store into the output block.
    for t in range(tb):
        b = bidx * tb + t

        @pl.when(b < batch)
        def _():
            for k in range(top_k):
                pltpu.make_async_copy(
                    feats_hbm.at[b, pl.ds(idx_ref[b, k], 1), :],
                    buf.at[t, pl.ds(k, 1), :],
                    sem.at[t, k]).wait()

    out_ref[...] = buf[...]


# ---------------------------------------------------------------------------
# Wrapper
# ---------------------------------------------------------------------------
def top_feats_selector(feats, attns, *, embed_dim, top_k, method="cls",
                       reduction="mean", i=0):
    """Pallas equivalent of TopFeatsSelector.forward."""
    assert reduction == "mean"  # TODO(synk): only 'mean' head-reduction implemented
    B, N, D = feats.shape
    assert D == embed_dim
    itemsize = jnp.dtype(feats.dtype).itemsize

    post = attns[f"blocks.{i}.attn.attn_drop"]
    _, L, S, _ = post.shape
    assert S >= 2 and N >= 1 and 1 <= top_k <= min(N, S - 1)

    # Only the CLS query row of the (B, L, S, S) tensor is ever needed.
    # TODO(synk): fuse this slice into the kernel via a strided manual DMA;
    # a (TB, L, 1, S) BlockSpec is blocked by the (8,128) block-shape rule.
    post_row = post[:, :, 0, :]                                      # (B, L, S)

    TB = min(8, B)                   # TB batch rows stacked in sublanes
    nb = pl.cdiv(B, TB)
    cparams = pltpu.CompilerParams(dimension_semantics=("parallel",))

    if method == "cls":
        kernel = functools.partial(_cls_topk_kernel, top_k=top_k, n_feats=N)
        inputs = (post_row,)
        in_specs = [pl.BlockSpec((TB, L, S), lambda b: (b, 0, 0))]
        bytes_in = B * L * S * itemsize
        transc = 0
    elif method == "maws":
        pre = attns[f"blocks.{i}.attn.pre_softmax"]
        # TODO(synk): stride-S column slice; have the upstream attention emit
        # the CLS column contiguously (or strided-DMA it in-kernel) to avoid
        # paying the XLA gather + materialised copy on v5e.
        pre_col = pre[:, :, :, 0]                                    # (B, L, S)
        kernel = functools.partial(_maws_topk_kernel, top_k=top_k, n_feats=N)
        inputs = (pre_col, post_row)
        in_specs = [pl.BlockSpec((TB, L, S), lambda b: (b, 0, 0)),
                    pl.BlockSpec((TB, L, S), lambda b: (b, 0, 0))]
        bytes_in = 2 * B * L * S * itemsize
        transc = B * S
    else:
        raise ValueError(f"unknown method {method!r}")

    # --- Pass 1: top-k patch indices (B, K) int32 ---------------------------
    idx = pl.pallas_call(
        kernel,
        out_shape=jax.ShapeDtypeStruct((B, top_k), jnp.int32),
        grid=(nb,),
        in_specs=in_specs,
        out_specs=pl.BlockSpec((TB, top_k), lambda b: (b, 0)),
        compiler_params=cparams,
        cost_estimate=pl.CostEstimate(
            flops=B * S * (len(inputs) * L + 4 * top_k),
            transcendentals=transc,
            bytes_accessed=bytes_in + B * top_k * 4),
    )(*inputs)

    # --- Pass 2: gather only the K selected feats rows straight from HBM ----
    gather = functools.partial(_gather_kernel, top_k=top_k, tb=TB, batch=B)
    out = pl.pallas_call(
        gather,
        out_shape=jax.ShapeDtypeStruct((B, top_k, D), feats.dtype),
        grid_spec=pltpu.PrefetchScalarGridSpec(
            num_scalar_prefetch=1,
            grid=(nb,),
            in_specs=[pl.BlockSpec(memory_space=pl.ANY)],   # feats stays in HBM
            out_specs=pl.BlockSpec((TB, top_k, D), lambda b, idx_ref: (b, 0, 0)),
            scratch_shapes=[pltpu.VMEM((TB, top_k, D), feats.dtype),
                            pltpu.SemaphoreType.DMA((TB, top_k))]),
        compiler_params=cparams,
        cost_estimate=pl.CostEstimate(
            flops=0,
            transcendentals=0,
            bytes_accessed=2 * B * top_k * D * itemsize + B * top_k * 4),
    )(idx, feats)
    return out


# ---------------------------------------------------------------------------
# Pure-JAX reference of the PyTorch forward (for verification)
# ---------------------------------------------------------------------------
def _reference(feats, attns, *, top_k, method="cls", i=0):
    post = jnp.mean(attns[f"blocks.{i}.attn.attn_drop"], axis=1)     # (B,S,S)
    if method == "cls":
        score = post[:, 0, 1:]
    else:
        pre = jnp.mean(attns[f"blocks.{i}.attn.pre_softmax"], axis=1)
        pre_sm = jax.nn.softmax(pre, axis=-2)[:, 1:, 0]
        score = pre_sm * post[:, 0, 1:]
    _, idx = lax.top_k(score, top_k)
    return jnp.take_along_axis(feats, idx[:, :, None], axis=1)


if __name__ == "__main__":
    B, L, S, D, K = 2, 4, 9, 32, 4   # S = 1 cls + 8 patches
    N = S - 1                        # feats hold the patch tokens

    key = jax.random.PRNGKey(0)
    k1, k2, k3 = jax.random.split(key, 3)

    feats = jax.random.normal(k1, (B, N, D), dtype=jnp.float32)
    pre_softmax = jax.random.normal(k2, (B, L, S, S), dtype=jnp.float32)
    attn_drop = jax.nn.softmax(jax.random.normal(k3, (B, L, S, S),
                                                 dtype=jnp.float32), axis=-1)
    attns = {
        "blocks.0.attn.pre_softmax": pre_softmax,
        "blocks.0.attn.attn_drop": attn_drop,
    }

    # default method ('cls')
    out_cls = top_feats_selector(feats, attns, embed_dim=D, top_k=K,
                                 method="cls")
    out_cls = jax.block_until_ready(out_cls)
    ref_cls = _reference(feats, attns, top_k=K, method="cls")
    assert out_cls.shape == (B, K, D)
    assert jnp.allclose(out_cls, ref_cls, atol=1e-6), "cls method mismatch"

    # 'maws' method
    out_maws = top_feats_selector(feats, attns, embed_dim=D, top_k=K,
                                  method="maws")
    out_maws = jax.block_until_ready(out_maws)
    ref_maws = _reference(feats, attns, top_k=K, method="maws")
    assert jnp.allclose(out_maws, ref_maws, atol=1e-6), "maws method mismatch"

    print("KERNEL_OK")
</pallas_src>

<mosaic_0001>
module attributes {stable_mosaic.version = 11 : i64} {
  func.func @_cls_topk_kernel(%arg0: i32, %arg1: memref<2x4x9xf32, #tpu.memory_space<vmem>>, %arg2: memref<2x4xi32, #tpu.memory_space<vmem>>) attributes {dimension_semantics = [#tpu.dimension_semantics<parallel>], iteration_bounds = array<i64: 1>, scalar_prefetch = 0 : i64, scratch_operands = 0 : i64, tpu.core_type = #tpu.core_type<tc>, window_params = [{transform_indices = @transform_0, window_bounds = array<i64: 2, 4, 9>}, {transform_indices = @transform_1, window_bounds = array<i64: 2, 4>}]} {
    %c0 = arith.constant 0 : index
    %c0_0 = arith.constant 0 : index
    %c0_1 = arith.constant 0 : index
    %0 = vector.load %arg1[%c0, %c0_0, %c0_1] : memref<2x4x9xf32, #tpu.memory_space<vmem>>, vector<2x4x9xf32>
    %cst = arith.constant dense<0.000000e+00> : vector<2x9xf32>
    %1 = vector.multi_reduction <add>, %0, %cst [1] : vector<2x4x9xf32> to vector<2x9xf32>
    %cst_2 = arith.constant 4.000000e+00 : f32
    %2 = vector.broadcast %cst_2 : f32 to vector<2x9xf32>
    %3 = arith.divf %1, %2 : vector<2x9xf32>
    %4 = tpu.iota {dimensions = array<i32: 1>} : vector<1x9xi32>
    %c0_i32 = arith.constant 0 : i32
    %5 = vector.broadcast %c0_i32 : i32 to vector<1x9xi32>
    %6 = arith.cmpi eq, %4, %5 : vector<1x9xi32>
    %cst_3 = arith.constant 0xFF800000 : f32
    %7 = vector.shape_cast %6 : vector<1x9xi1> to vector<1x9xi1>
    %8 = vector.broadcast %7 : vector<1x9xi1> to vector<2x9xi1>
    %9 = vector.broadcast %cst_3 : f32 to vector<2x9xf32>
    %10 = arith.select %8, %9, %3 : vector<2x9xi1>, vector<2x9xf32>
    %11 = tpu.iota {dimensions = array<i32: 1>} : vector<1x9xi32>
    %12 = tpu.iota {dimensions = array<i32: 1>} : vector<1x4xi32>
    %c0_i32_4 = arith.constant 0 : i32
    %13 = vector.broadcast %c0_i32_4 : i32 to vector<2x4xi32>
    %cst_5 = arith.constant dense<0xFF800000> : vector<2xf32>
    %14 = vector.multi_reduction <maximumf>, %10, %cst_5 [1] : vector<2x9xf32> to vector<2xf32>
    %15 = vector.shape_cast %14 : vector<2xf32> to vector<2x1xf32>
    %16 = vector.broadcast %15 : vector<2x1xf32> to vector<2x9xf32>
    %17 = arith.cmpf oeq, %10, %16 : vector<2x9xf32>
    %c9_i32 = arith.constant 9 : i32
    %18 = vector.shape_cast %11 : vector<1x9xi32> to vector<1x9xi32>
    %19 = vector.broadcast %18 : vector<1x9xi32> to vector<2x9xi32>
    %20 = vector.broadcast %c9_i32 : i32 to vector<2x9xi32>
    %21 = arith.select %17, %19, %20 : vector<2x9xi1>, vector<2x9xi32>
    %cst_6 = arith.constant dense<2147483647> : vector<2xi32>
    %22 = vector.multi_reduction <minsi>, %21, %cst_6 [1] : vector<2x9xi32> to vector<2xi32>
    %23 = vector.shape_cast %22 : vector<2xi32> to vector<2x1xi32>
    %c1_i32 = arith.constant 1 : i32
    %c8_i32 = arith.constant 8 : i32
    %24 = vector.broadcast %c1_i32 : i32 to vector<2x1xi32>
    %25 = arith.maxsi %24, %23 : vector<2x1xi32>
    %26 = vector.broadcast %c8_i32 : i32 to vector<2x1xi32>
    %27 = arith.minsi %26, %25 : vector<2x1xi32>
    %c1_i32_7 = arith.constant 1 : i32
    %28 = vector.broadcast %c1_i32_7 : i32 to vector<2x1xi32>
    %29 = arith.subi %27, %28 : vector<2x1xi32>
    %c0_i32_8 = arith.constant 0 : i32
    %30 = vector.broadcast %c0_i32_8 : i32 to vector<1x4xi32>
    %31 = arith.cmpi eq, %12, %30 : vector<1x4xi32>
    %32 = vector.shape_cast %31 : vector<1x4xi1> to vector<1x4xi1>
    %33 = vector.broadcast %32 : vector<1x4xi1> to vector<2x4xi1>
    %34 = vector.shape_cast %29 : vector<2x1xi32> to vector<2x1xi32>
    %35 = vector.broadcast %34 : vector<2x1xi32> to vector<2x4xi32>
    %36 = arith.select %33, %35, %13 : vector<2x4xi1>, vector<2x4xi32>
    %37 = vector.broadcast %11 : vector<1x9xi32> to vector<2x9xi32>
    %38 = vector.broadcast %23 : vector<2x1xi32> to vector<2x9xi32>
    %39 = arith.cmpi eq, %37, %38 : vector<2x9xi32>
    %cst_9 = arith.constant 0xFF800000 : f32
    %40 = vector.broadcast %cst_9 : f32 to vector<2x9xf32>
    %41 = arith.select %39, %40, %10 : vector<2x9xi1>, vector<2x9xf32>
    %cst_10 = arith.constant dense<0xFF800000> : vector<2xf32>
    %42 = vector.multi_reduction <maximumf>, %41, %cst_10 [1] : vector<2x9xf32> to vector<2xf32>
    %43 = vector.shape_cast %42 : vector<2xf32> to vector<2x1xf32>
    %44 = vector.broadcast %43 : vector<2x1xf32> to vector<2x9xf32>
    %45 = arith.cmpf oeq, %41, %44 : vector<2x9xf32>
    %c9_i32_11 = arith.constant 9 : i32
    %46 = vector.shape_cast %11 : vector<1x9xi32> to vector<1x9xi32>
    %47 = vector.broadcast %46 : vector<1x9xi32> to vector<2x9xi32>
    %48 = vector.broadcast %c9_i32_11 : i32 to vector<2x9xi32>
    %49 = arith.select %45, %47, %48 : vector<2x9xi1>, vector<2x9xi32>
    %cst_12 = arith.constant dense<2147483647> : vector<2xi32>
    %50 = vector.multi_reduction <minsi>, %49, %cst_12 [1] : vector<2x9xi32> to vector<2xi32>
    %51 = vector.shape_cast %50 : vector<2xi32> to vector<2x1xi32>
    %c1_i32_13 = arith.constant 1 : i32
    %c8_i32_14 = arith.constant 8 : i32
    %52 = vector.broadcast %c1_i32_13 : i32 to vector<2x1xi32>
    %53 = arith.maxsi %52, %51 : vector<2x1xi32>
    %54 = vector.broadcast %c8_i32_14 : i32 to vector<2x1xi32>
    %55 = arith.minsi %54, %53 : vector<2x1xi32>
    %c1_i32_15 = arith.constant 1 : i32
    %56 = vector.broadcast %c1_i32_15 : i32 to vector<2x1xi32>
    %57 = arith.subi %55, %56 : vector<2x1xi32>
    %c1_i32_16 = arith.constant 1 : i32
    %58 = vector.broadcast %c1_i32_16 : i32 to vector<1x4xi32>
    %59 = arith.cmpi eq, %12, %58 : vector<1x4xi32>
    %60 = vector.shape_cast %59 : vector<1x4xi1> to vector<1x4xi1>
    %61 = vector.broadcast %60 : vector<1x4xi1> to vector<2x4xi1>
    %62 = vector.shape_cast %57 : vector<2x1xi32> to vector<2x1xi32>
    %63 = vector.broadcast %62 : vector<2x1xi32> to vector<2x4xi32>
    %64 = arith.select %61, %63, %36 : vector<2x4xi1>, vector<2x4xi32>
    %65 = vector.broadcast %11 : vector<1x9xi32> to vector<2x9xi32>
    %66 = vector.broadcast %51 : vector<2x1xi32> to vector<2x9xi32>
    %67 = arith.cmpi eq, %65, %66 : vector<2x9xi32>
    %cst_17 = arith.constant 0xFF800000 : f32
    %68 = vector.broadcast %cst_17 : f32 to vector<2x9xf32>
    %69 = arith.select %67, %68, %41 : vector<2x9xi1>, vector<2x9xf32>
    %cst_18 = arith.constant dense<0xFF800000> : vector<2xf32>
    %70 = vector.multi_reduction <maximumf>, %69, %cst_18 [1] : vector<2x9xf32> to vector<2xf32>
    %71 = vector.shape_cast %70 : vector<2xf32> to vector<2x1xf32>
    %72 = vector.broadcast %71 : vector<2x1xf32> to vector<2x9xf32>
    %73 = arith.cmpf oeq, %69, %72 : vector<2x9xf32>
    %c9_i32_19 = arith.constant 9 : i32
    %74 = vector.shape_cast %11 : vector<1x9xi32> to vector<1x9xi32>
    %75 = vector.broadcast %74 : vector<1x9xi32> to vector<2x9xi32>
    %76 = vector.broadcast %c9_i32_19 : i32 to vector<2x9xi32>
    %77 = arith.select %73, %75, %76 : vector<2x9xi1>, vector<2x9xi32>
    %cst_20 = arith.constant dense<2147483647> : vector<2xi32>
    %78 = vector.multi_reduction <minsi>, %77, %cst_20 [1] : vector<2x9xi32> to vector<2xi32>
    %79 = vector.shape_cast %78 : vector<2xi32> to vector<2x1xi32>
    %c1_i32_21 = arith.constant 1 : i32
    %c8_i32_22 = arith.constant 8 : i32
    %80 = vector.broadcast %c1_i32_21 : i32 to vector<2x1xi32>
    %81 = arith.maxsi %80, %79 : vector<2x1xi32>
    %82 = vector.broadcast %c8_i32_22 : i32 to vector<2x1xi32>
    %83 = arith.minsi %82, %81 : vector<2x1xi32>
    %c1_i32_23 = arith.constant 1 : i32
    %84 = vector.broadcast %c1_i32_23 : i32 to vector<2x1xi32>
    %85 = arith.subi %83, %84 : vector<2x1xi32>
    %c2_i32 = arith.constant 2 : i32
    %86 = vector.broadcast %c2_i32 : i32 to vector<1x4xi32>
    %87 = arith.cmpi eq, %12, %86 : vector<1x4xi32>
    %88 = vector.shape_cast %87 : vector<1x4xi1> to vector<1x4xi1>
    %89 = vector.broadcast %88 : vector<1x4xi1> to vector<2x4xi1>
    %90 = vector.shape_cast %85 : vector<2x1xi32> to vector<2x1xi32>
    %91 = vector.broadcast %90 : vector<2x1xi32> to vector<2x4xi32>
    %92 = arith.select %89, %91, %64 : vector<2x4xi1>, vector<2x4xi32>
    %93 = vector.broadcast %11 : vector<1x9xi32> to vector<2x9xi32>
    %94 = vector.broadcast %79 : vector<2x1xi32> to vector<2x9xi32>
    %95 = arith.cmpi eq, %93, %94 : vector<2x9xi32>
    %cst_24 = arith.constant 0xFF800000 : f32
    %96 = vector.broadcast %cst_24 : f32 to vector<2x9xf32>
    %97 = arith.select %95, %96, %69 : vector<2x9xi1>, vector<2x9xf32>
    %cst_25 = arith.constant dense<0xFF800000> : vector<2xf32>
    %98 = vector.multi_reduction <maximumf>, %97, %cst_25 [1] : vector<2x9xf32> to vector<2xf32>
    %99 = vector.shape_cast %98 : vector<2xf32> to vector<2x1xf32>
    %100 = vector.broadcast %99 : vector<2x1xf32> to vector<2x9xf32>
    %101 = arith.cmpf oeq, %97, %100 : vector<2x9xf32>
    %c9_i32_26 = arith.constant 9 : i32
    %102 = vector.shape_cast %11 : vector<1x9xi32> to vector<1x9xi32>
    %103 = vector.broadcast %102 : vector<1x9xi32> to vector<2x9xi32>
    %104 = vector.broadcast %c9_i32_26 : i32 to vector<2x9xi32>
    %105 = arith.select %101, %103, %104 : vector<2x9xi1>, vector<2x9xi32>
    %cst_27 = arith.constant dense<2147483647> : vector<2xi32>
    %106 = vector.multi_reduction <minsi>, %105, %cst_27 [1] : vector<2x9xi32> to vector<2xi32>
    %107 = vector.shape_cast %106 : vector<2xi32> to vector<2x1xi32>
    %c1_i32_28 = arith.constant 1 : i32
    %c8_i32_29 = arith.constant 8 : i32
    %108 = vector.broadcast %c1_i32_28 : i32 to vector<2x1xi32>
    %109 = arith.maxsi %108, %107 : vector<2x1xi32>
    %110 = vector.broadcast %c8_i32_29 : i32 to vector<2x1xi32>
    %111 = arith.minsi %110, %109 : vector<2x1xi32>
    %c1_i32_30 = arith.constant 1 : i32
    %112 = vector.broadcast %c1_i32_30 : i32 to vector<2x1xi32>
    %113 = arith.subi %111, %112 : vector<2x1xi32>
    %c3_i32 = arith.constant 3 : i32
    %114 = vector.broadcast %c3_i32 : i32 to vector<1x4xi32>
    %115 = arith.cmpi eq, %12, %114 : vector<1x4xi32>
    %116 = vector.shape_cast %115 : vector<1x4xi1> to vector<1x4xi1>
    %117 = vector.broadcast %116 : vector<1x4xi1> to vector<2x4xi1>
    %118 = vector.shape_cast %113 : vector<2x1xi32> to vector<2x1xi32>
    %119 = vector.broadcast %118 : vector<2x1xi32> to vector<2x4xi32>
    %120 = arith.select %117, %119, %92 : vector<2x4xi1>, vector<2x4xi32>
    %c0_31 = arith.constant 0 : index
    %c0_32 = arith.constant 0 : index
    %121 = vector.load %arg2[%c0_31, %c0_32] : memref<2x4xi32, #tpu.memory_space<vmem>>, vector<2x4xi32>
    tpu.vector_store %arg2[%c0_31, %c0_32], %120 {strides = array<i32>} : memref<2x4xi32, #tpu.memory_space<vmem>>, vector<2x4xi32>,
    return
  }
  func.func @transform_0(%arg0: i32) -> (i32, i32, i32) {
    %c0_i32 = arith.constant 0 : i32
    %c0_i32_0 = arith.constant 0 : i32
    %c0_i32_1 = arith.constant 0 : i32
    return %arg0, %c0_i32, %c0_i32_0 : i32, i32, i32
  }
  func.func @transform_1(%arg0: i32) -> (i32, i32) {
    %c0_i32 = arith.constant 0 : i32
    %c0_i32_0 = arith.constant 0 : i32
    return %arg0, %c0_i32 : i32, i32
  }
}

</mosaic_0001>

<llo_original>
// kernel: tpu_custom_call.1
$region0: #{tpu_custom_call.1}
  #allocation0 [shape = 'u32[]', space=smem, size = 0x4, offset = 0x4, fixed_abs, tag = 'smem constant byte address 0x4 - core index']
  #allocation1 [shape = 'u32[144,128]{1,0:T(1,128)}', space=vmem, size = 0x12000, scoped, tag = 'internal scratch']
  %s0 = inlined_call_operand.hbm [shape: f32[2,4,9], index: 0, kind: input, shape index: {}]
  %s1 = inlined_call_operand.hbm [shape: s32[2,4], index: 1, kind: output, shape index: {}]
  %s2 = sld [smem:[#allocation0]]
  $region18: #{tpu_custom_call.1} parent=0
    _
  %s4 = ssub.s32 1, %s2
  %s5 = scalar_select 0, %s4, %s2
  $region1: #{tpu_custom_call.1} parent=0
    #allocation2 [shape = 'u8[4096]{0}', space=vmem, size = 0x1000, scoped, tag = 'input window, operand 0, single buffered']
    #allocation3 [shape = 's32[1]{0}', space=sflag, size = 0x4, scoped, tag = 'scoped memory for tpu_custom_call.1']
    #allocation4 [shape = 's32[1]{0}', space=sflag, size = 0x4, scoped, tag = 'scoped memory for tpu_custom_call.1']
    #allocation5 [shape = 'u8[1024]{0}', space=vmem, size = 0x400, scoped, tag = 'output window, operand 0, single buffered']
    %6 = vsyncpa [#allocation3], 0
    %7 = vsyncpa [#allocation4], 0
    // Predicated region
    $region2: #{tpu_custom_call.1} parent=1 // pred_check
      _
    $region3: #{tpu_custom_call.1} parent=1 // pred_check_branch
      %9 = sbr.rel (0) target = $region5
    $region4: #{tpu_custom_call.1} parent=1 // pred_region
      %s11 = ssub.s32 128, 128
      %12 = vsyncadd [#allocation3], %s11
      %s13 = sshll.u32 [#allocation2], 4
      %s14 = int_to_ptr.vmem [resolvable:$true] %s13
      %19 = dma.hbm_to_vmem [thread:$0]  %s0, 128, %s14, [#allocation3], 64, 64, 4
    $region5: #{tpu_custom_call.1} parent=1 // pred_fallthru
      _
    // Predicated region
    $region6: #{tpu_custom_call.1} parent=1 // pred_check
      _
    $region7: #{tpu_custom_call.1} parent=1 // pred_check_branch
      %21 = sbr.rel (0) target = $region9
    $region8: #{tpu_custom_call.1} parent=1 // pred_region
      %22 = dma.done [#allocation3], 128
    $region9: #{tpu_custom_call.1} parent=1 // pred_fallthru
      _
    %v23 = vld [vmem:[#allocation2] sm:$0xf]
    %v24 = vld [vmem:[#allocation2 + $0x4] sm:$0xf]
    %vm25 = vcmask 68608
    %v26 = vsel %vm25, %v23, 0.0
    %v27 = vrot.slane %v26, 4
    %v28 = vadd.f32 %v26, %v27
    %v29 = vrot.slane %v28, 2
    %v30 = vadd.f32 %v28, %v29
    %v31 = vrot.slane %v30, 1
    %v32 = vadd.f32 %v30, %v31
    %v33 = vsel %vm25, %v24, 0.0
    %v34 = vrot.slane %v33, 4
    %v35 = vadd.f32 %v33, %v34
    %v36 = vrot.slane %v35, 2
    %v37 = vadd.f32 %v35, %v36
    %v38 = vrot.slane %v37, 1
    %v39 = vadd.f32 %v37, %v38
    %v40 = vrcp.pop 4.0
    %v41 = vmul.f32 %v32, %v40
    %v42 = vmul.f32 %v39, %v40
    %v43 = vlaneseq
    %v44 = vand.u32 %v43, 127
    %vm45 = vcmp.eq.s32.totalorder %v44, 0
    %v46 = vsel %vm45, 1, 0
    %vm47 = vcmp.eq.s32.totalorder %v46, 1
    %vm50 = vcmask 1041409
    %v51 = vsel %vm50, %v42, %v41
    %v53 = vsel %vm47, -inf, %v51
    %vm54 = vcmask 66560
    %v55 = vsel %vm54, %v53, -inf
    %56 = vmax.xlane.f32.xlu0 %v55
    %v57 = vpop.xlane.xlu0 %56
    %vm58 = vcmp.eq.f32.partialorder %v53, %v57
    %v59 = vsel %vm58, %v44, 9
    %v60 = vsel %vm54, %v59, 2147483647
    %v61 = vand.u32 %v60, 65535
    %v62 = vshra.s32 %v60, 16
    %v63 = vcvt.s32.f32 %v61
    %v64 = vcvt.s32.f32 %v62
    %65 = vmin.xlane.f32.xlu0 %v64
    %v66 = vpop.xlane.xlu0 %65
    %vm67 = vcmp.eq.f32.partialorder %v64, %v66
    %v68 = vsel %vm67, %v63, inf
    %69 = vmin.xlane.f32.xlu0 %v68
    %v70 = vpop.xlane.xlu0 %69
    %v71 = vcvt.f32.s32 %v70
    %v72 = vcvt.f32.s32 %v66
    %v73 = vshll.u32 %v72, 16
    %v74 = vadd.s32 %v73, %v71
    %vm75 = vcmp.gt.s32.totalorder %v74, 1
    %v76 = vsel %vm75, %v74, 1
    %vm77 = vcmp.lt.s32.totalorder %v76, 8
    %v78 = vsel %vm77, %v76, 8
    %v79 = vsub.s32 %v78, 1
    %v80 = vsel %vm47, %v79, 0
    %vm81 = vcmp.eq.s32.totalorder %v44, %v74
    %v82 = vsel %vm81, -inf, %v53
    %v83 = vsel %vm54, %v82, -inf
    %84 = vmax.xlane.f32.xlu0 %v83
    %v85 = vpop.xlane.xlu0 %84
    %vm86 = vcmp.eq.f32.partialorder %v82, %v85
    %v87 = vsel %vm86, %v44, 9
    %v88 = vsel %vm54, %v87, 2147483647
    %v89 = vand.u32 %v88, 65535
    %v90 = vshra.s32 %v88, 16
    %v91 = vcvt.s32.f32 %v89
    %v92 = vcvt.s32.f32 %v90
    %93 = vmin.xlane.f32.xlu0 %v92
    %v94 = vpop.xlane.xlu0 %93
    %vm95 = vcmp.eq.f32.partialorder %v92, %v94
    %v96 = vsel %vm95, %v91, inf
    %97 = vmin.xlane.f32.xlu0 %v96
    %v98 = vpop.xlane.xlu0 %97
    %v99 = vcvt.f32.s32 %v98
    %v100 = vcvt.f32.s32 %v94
    %v101 = vshll.u32 %v100, 16
    %v102 = vadd.s32 %v101, %v99
    %vm103 = vcmp.gt.s32.totalorder %v102, 1
    %v104 = vsel %vm103, %v102, 1
    %vm105 = vcmp.lt.s32.totalorder %v104, 8
    %v106 = vsel %vm105, %v104, 8
    %v107 = vsub.s32 %v106, 1
    %vm108 = vcmp.eq.s32.totalorder %v44, 1
    %v109 = vsel %vm108, 1, 0
    %vm110 = vcmp.eq.s32.totalorder %v109, 1
    %v111 = vsel %vm110, %v107, %v80
    %vm112 = vcmp.eq.s32.totalorder %v44, %v102
    %v113 = vsel %vm112, -inf, %v82
    %v114 = vsel %vm54, %v113, -inf
    %115 = vmax.xlane.f32.xlu0 %v114
    %v116 = vpop.xlane.xlu0 %115
    %vm117 = vcmp.eq.f32.partialorder %v113, %v116
    %v118 = vsel %vm117, %v44, 9
    %v119 = vsel %vm54, %v118, 2147483647
    %v120 = vand.u32 %v119, 65535
    %v121 = vshra.s32 %v119, 16
    %v122 = vcvt.s32.f32 %v120
    %v123 = vcvt.s32.f32 %v121
    %124 = vmin.xlane.f32.xlu0 %v123
    %v125 = vpop.xlane.xlu0 %124
    %vm126 = vcmp.eq.f32.partialorder %v123, %v125
    %v127 = vsel %vm126, %v122, inf
    %128 = vmin.xlane.f32.xlu0 %v127
    %v129 = vpop.xlane.xlu0 %128
    %v130 = vcvt.f32.s32 %v129
    %v131 = vcvt.f32.s32 %v125
    %v132 = vshll.u32 %v131, 16
    %v133 = vadd.s32 %v132, %v130
    %vm134 = vcmp.gt.s32.totalorder %v133, 1
    %v135 = vsel %vm134, %v133, 1
    %vm136 = vcmp.lt.s32.totalorder %v135, 8
    %v137 = vsel %vm136, %v135, 8
    %v138 = vsub.s32 %v137, 1
    %vm139 = vcmp.eq.s32.totalorder %v44, 2
    %v140 = vsel %vm139, 1, 0
    %vm141 = vcmp.eq.s32.totalorder %v140, 1
    %v142 = vsel %vm141, %v138, %v111
    %vm143 = vcmp.eq.s32.totalorder %v44, %v133
    %v144 = vsel %vm143, -inf, %v113
    %v145 = vsel %vm54, %v144, -inf
    %146 = vmax.xlane.f32.xlu0 %v145
    %v147 = vpop.xlane.xlu0 %146
    %vm148 = vcmp.eq.f32.partialorder %v144, %v147
    %v149 = vsel %vm148, %v44, 9
    %v150 = vsel %vm54, %v149, 2147483647
    %v151 = vand.u32 %v150, 65535
    %v152 = vshra.s32 %v150, 16
    %v153 = vcvt.s32.f32 %v151
    %v154 = vcvt.s32.f32 %v152
    %155 = vmin.xlane.f32.xlu0 %v154
    %v156 = vpop.xlane.xlu0 %155
    %vm157 = vcmp.eq.f32.partialorder %v154, %v156
    %v158 = vsel %vm157, %v153, inf
    %159 = vmin.xlane.f32.xlu0 %v158
    %v160 = vpop.xlane.xlu0 %159
    %v161 = vcvt.f32.s32 %v160
    %v162 = vcvt.f32.s32 %v156
    %v163 = vshll.u32 %v162, 16
    %v164 = vadd.s32 %v163, %v161
    %vm165 = vcmp.gt.s32.totalorder %v164, 1
    %v166 = vsel %vm165, %v164, 1
    %vm167 = vcmp.lt.s32.totalorder %v166, 8
    %v168 = vsel %vm167, %v166, 8
    %v169 = vsub.s32 %v168, 1
    %vm170 = vcmp.eq.s32.totalorder %v44, 3
    %v171 = vsel %vm170, 1, 0
    %vm172 = vcmp.eq.s32.totalorder %v171, 1
    %v173 = vsel %vm172, %v169, %v142
    %vm174 = vcmask 25600
    %175 = vst.msk [vmem:[#allocation5] sm:$0x3] %vm174, %v173
    // Predicated region
    $region10: #{tpu_custom_call.1} parent=1 // pred_check
      _
    $region11: #{tpu_custom_call.1} parent=1 // pred_check_branch
      %177 = sbr.rel (0) target = $region13
    $region12: #{tpu_custom_call.1} parent=1 // pred_region
      %s179 = ssub.s32 32, 32
      %180 = vsyncadd [#allocation4], %s179
      %s182 = sshll.u32 [#allocation5], 4
      %s183 = int_to_ptr.vmem [resolvable:$true] %s182
      %185 = dma.vmem_to_hbm [thread:$0]  %s183, 32, %s1, [#allocation4]
    $region13: #{tpu_custom_call.1} parent=1 // pred_fallthru
      _
    // Predicated region
    $region14: #{tpu_custom_call.1} parent=1 // pred_check
      _
    $region15: #{tpu_custom_call.1} parent=1 // pred_check_branch
      %187 = sbr.rel (0) target = $region17
    $region16: #{tpu_custom_call.1} parent=1 // pred_region
      %188 = dma.done [#allocation4], 32
    $region17: #{tpu_custom_call.1} parent=1 // pred_fallthru
      _
    %189 = vsyncpa [#allocation3], 1
    %190 = vsyncpa [#allocation4], 1

</llo_original>
